<compile_context>
chip_gen: v5e
topology: v5e:2x2
jax: 0.10.0
libtpu: 0.0.40
codegen_flags: <defaults>
</compile_context>

<pallas_src>
from typing import NamedTuple

import numpy as np
import jax
import jax.numpy as jnp
from jax.experimental import pallas as pl
from jax.experimental.pallas import tpu as pltpu

_LANE = 128        # vreg lane width
_SUBLANE = 8       # f32 sublane count
_NEG_BIG = -1e30   # bias for padded output columns -> exp() underflows to 0

# VMEM budget (bytes) for the double-buffered K-dependent tiles (x tile + w1
# tile); beyond this, dim_in is tiled along a K grid axis.  Sized so the full
# plan fits v7x's 64 MiB physical VMEM with TM up to 256.
_K_RESIDENT_BUDGET = 16 << 20


def _round_up(v, m):
    return ((v + m - 1) // m) * m


def _device_kind():
    try:
        return jax.devices()[0].device_kind.lower()
    except Exception:
        return ""


def _choose_tk(dim_in, hp):
    """K-tile size: whole dim_in if it fits the resident budget, else a lane-
    aligned tile (assumes TM<=256, f32 activations — conservative)."""
    per_k = 2 * (hp * 2 + 256 * 4)  # double-buffered bf16 w1 row + f32 x col
    if dim_in * per_k <= _K_RESIDENT_BUDGET:
        return dim_in
    tk = (_K_RESIDENT_BUDGET // per_k) // _LANE * _LANE
    return max(_LANE, int(tk))


def _pick_tm(b_eff, cap, prefer_two_tiles):
    tm = min(cap, _round_up(b_eff, _SUBLANE))
    tm = _round_up(tm, _SUBLANE)
    if prefer_two_tiles and b_eff >= 2 * _SUBLANE and -(-b_eff // tm) < 2:
        # v7x: make sure there are >=2 batch tiles so both TensorCores work.
        tm = _round_up(-(-b_eff // 2), _SUBLANE)
    return tm


class PackedMLP(NamedTuple):
    w1: jax.Array        # (Kp, Hp)  bf16, zero padded
    b1: jax.Array        # (1, Hp)   f32,  zero padded
    w2: jax.Array        # (Hp, Op)  bf16, zero padded
    b2: jax.Array        # (1, Op)   f32,  padded cols = -1e30
    dim_in: int
    dim_hidden: int
    dim_out: int
    tk: int              # K tile size used by the kernel grid


def pack_params(w1, b1, w2, b2):
    """One-time pre-pack of weights (pad to lane-dense widths, cast to bf16).

    Weights are expected in (in_features, out_features) layout, i.e. the
    transpose of torch's nn.Linear.weight, so the kernel computes x @ W.
    Call this once and reuse the result across forward calls.
    """
    dim_in, dim_hidden = w1.shape
    dim_out = w2.shape[1]
    hp = _round_up(dim_hidden, _LANE)
    op = _round_up(dim_out, _LANE)
    tk = _choose_tk(dim_in, hp)
    kp = _round_up(dim_in, tk)

    w1_p = jnp.zeros((kp, hp), jnp.bfloat16).at[:dim_in, :dim_hidden].set(
        w1.astype(jnp.bfloat16))
    b1_p = jnp.zeros((1, hp), jnp.float32).at[:, :dim_hidden].set(
        jnp.asarray(b1, jnp.float32)[None, :])
    w2_p = jnp.zeros((hp, op), jnp.bfloat16).at[:dim_hidden, :dim_out].set(
        w2.astype(jnp.bfloat16))
    b2_p = jnp.full((1, op), _NEG_BIG, jnp.float32).at[:, :dim_out].set(
        jnp.asarray(b2, jnp.float32)[None, :])
    return PackedMLP(w1_p, b1_p, w2_p, b2_p, dim_in, dim_hidden, dim_out, tk)


def mlp_kernel(x_ref, w1_ref, b1_ref, w2_ref, b2_ref, o_ref, h_acc):
    k = pl.program_id(1)

    @pl.when(k == 0)
    def _():
        h_acc[...] = jnp.zeros_like(h_acc)

    # Linear 1 partial product: cast f32 activations to bf16 right before the
    # MXU; accumulate in f32 VMEM scratch across the K grid axis.
    h_acc[...] += jnp.dot(x_ref[...].astype(jnp.bfloat16), w1_ref[...],
                          preferred_element_type=jnp.float32)

    @pl.when(k == pl.num_programs(1) - 1)
    def _():
        # TODO(synk): nn.Dropout() is identity in eval mode; training-mode
        # dropout (pltpu.prng_seed/prng_random_bits mask + 1/(1-p)) not emitted.
        h = jnp.maximum(h_acc[...] + b1_ref[...], 0.0)          # bias + ReLU (f32 VPU)

        # Linear 2 (bf16 MXU, f32 accumulate).  Padded output columns have zero
        # weight columns and a -1e30 bias, so they vanish in the softmax below.
        logits = jnp.dot(h.astype(jnp.bfloat16), w2_ref[...],
                         preferred_element_type=jnp.float32) + b2_ref[...]

        # Softmax over dim=1 (class axis); padded cols: exp(-1e30 - m) == 0.
        m = jnp.max(logits, axis=1, keepdims=True)
        e = jnp.exp(logits - m)
        denom = jnp.sum(e, axis=1, keepdims=True)
        o_ref[...] = (e * pl.reciprocal(denom, approx=True)).astype(o_ref.dtype)


def mlp_forward(x_nchw, packed: PackedMLP, *, out_dtype=jnp.float32, tm=None):
    """x_nchw: (B, C, H, W).  Returns softmax probs (B, dim_out) in out_dtype."""
    B = x_nchw.shape[0]
    dim_in = x_nchw.shape[1] * x_nchw.shape[-2] * x_nchw.shape[-1]
    assert dim_in == packed.dim_in, "input feature size mismatch with packed params"

    x = x_nchw.reshape(B, dim_in)           # matches torch .view(-1, C*H*W)

    kp, hp = packed.w1.shape
    op = packed.w2.shape[1]
    tk = packed.tk
    nk = kp // tk

    # Rare path: huge, non-lane-aligned dim_in needs K padding of x (weights
    # were padded once at pack time).  The common case is a no-op.
    if dim_in != kp:
        x = jnp.pad(x, ((0, 0), (0, kp - dim_in)))

    # Keep at least one sublane tile of rows; larger ragged batches use Pallas
    # partial last blocks (out-of-bounds output rows are dropped).
    b_eff = B
    if b_eff < _SUBLANE:
        x = jnp.pad(x, ((0, _SUBLANE - b_eff), (0, 0)))
        b_eff = _SUBLANE

    kind = _device_kind()
    cap = tm if tm is not None else (256 if ("v6" in kind or "v7" in kind) else 128)
    TM = _pick_tm(b_eff, cap, prefer_two_tiles=("v7" in kind))
    grid = (pl.cdiv(b_eff, TM), nk)

    out_itemsize = np.dtype(out_dtype).itemsize
    bytes_needed = (
        2 * TM * tk * x.dtype.itemsize      # x tile (double-buffered)
        + 2 * tk * hp * 2                   # w1 tile bf16 (double-buffered)
        + 2 * hp * op * 2                   # w2 (resident, pipeline allocs 2)
        + 2 * (hp + op) * 4                 # biases
        + 2 * TM * op * out_itemsize        # output tile (double-buffered)
        + TM * hp * 4                       # f32 hidden accumulator scratch
    )
    vmem_limit = int(min(max(int(bytes_needed * 1.5) + (2 << 20), 16 << 20), 64 << 20))

    out = pl.pallas_call(
        mlp_kernel,
        out_shape=jax.ShapeDtypeStruct((b_eff, op), out_dtype),
        grid_spec=pltpu.PrefetchScalarGridSpec(
            num_scalar_prefetch=0,
            grid=grid,
            in_specs=[
                pl.BlockSpec((TM, tk), lambda i, k: (i, k)),   # x tile (f32)
                pl.BlockSpec((tk, hp), lambda i, k: (k, 0)),   # w1 K-tile (bf16)
                pl.BlockSpec((1, hp),  lambda i, k: (0, 0)),   # b1 (resident)
                pl.BlockSpec((hp, op), lambda i, k: (0, 0)),   # w2 (resident)
                pl.BlockSpec((1, op),  lambda i, k: (0, 0)),   # b2 (resident)
            ],
            out_specs=pl.BlockSpec((TM, op), lambda i, k: (i, 0)),
            scratch_shapes=[pltpu.VMEM((TM, hp), jnp.float32)],
        ),
        compiler_params=pltpu.CompilerParams(
            dimension_semantics=("parallel", "arbitrary"),
            vmem_limit_bytes=vmem_limit),
    )(x, packed.w1, packed.b1, packed.w2, packed.b2)

    return out[:B, :packed.dim_out]


def init_params(key, dim_in, dim_hidden, dim_out):
    """Deterministic nn.Linear-style init (uniform +/- 1/sqrt(fan_in)).
    Weights stored transposed vs. torch: (in_features, out_features)."""
    k1, k2, k3, k4 = jax.random.split(key, 4)
    lim1 = 1.0 / (dim_in ** 0.5)
    lim2 = 1.0 / (dim_hidden ** 0.5)
    w1 = jax.random.uniform(k1, (dim_in, dim_hidden), jnp.float32, -lim1, lim1)
    b1 = jax.random.uniform(k2, (dim_hidden,),         jnp.float32, -lim1, lim1)
    w2 = jax.random.uniform(k3, (dim_hidden, dim_out), jnp.float32, -lim2, lim2)
    b2 = jax.random.uniform(k4, (dim_out,),            jnp.float32, -lim2, lim2)
    return w1, b1, w2, b2


if __name__ == "__main__":
    key = jax.random.PRNGKey(0)
    kx, kp = jax.random.split(key)

    # Small shapes: batch=2, channels=4, spatial=16x16 -> dim_in = 4*16*16 = 1024
    B, C, H, W = 2, 4, 16, 16
    dim_in, dim_hidden, dim_out = C * H * W, 32, 16

    x = jax.random.normal(kx, (B, C, H, W), jnp.float32)
    w1, b1, w2, b2 = init_params(kp, dim_in, dim_hidden, dim_out)

    packed = pack_params(w1, b1, w2, b2)      # one-time pre-pack (cached across calls)
    out = mlp_forward(x, packed)
    out = jax.block_until_ready(out)

    # Reference with the same bf16-in / f32-accumulate numerics as the kernel.
    xf = x.reshape(B, dim_in).astype(jnp.bfloat16)
    h_ref = jnp.dot(xf, w1.astype(jnp.bfloat16),
                    preferred_element_type=jnp.float32) + b1
    h_ref = jnp.maximum(h_ref, 0.0)
    logits_ref = jnp.dot(h_ref.astype(jnp.bfloat16), w2.astype(jnp.bfloat16),
                         preferred_element_type=jnp.float32) + b2
    ref = jax.nn.softmax(logits_ref, axis=1)

    assert out.shape == (B, dim_out)
    assert bool(jnp.all(jnp.isfinite(out)))
    assert jnp.allclose(jnp.sum(out, axis=1), 1.0, atol=2e-3)
    assert jnp.allclose(out, ref, atol=2e-3, rtol=2e-3)

    print("KERNEL_OK")
</pallas_src>

<mosaic_0001>
module attributes {stable_mosaic.version = 11 : i64} {
  func.func @mlp_kernel(%arg0: i32, %arg1: i32, %arg2: memref<8x1024xf32, #tpu.memory_space<vmem>>, %arg3: memref<1024x128xbf16, #tpu.memory_space<vmem>>, %arg4: memref<1x128xf32, #tpu.memory_space<vmem>>, %arg5: memref<128x128xbf16, #tpu.memory_space<vmem>>, %arg6: memref<1x128xf32, #tpu.memory_space<vmem>>, %arg7: memref<8x128xf32, #tpu.memory_space<vmem>>, %arg8: memref<8x128xf32, #tpu.memory_space<vmem>>) attributes {dimension_semantics = [#tpu.dimension_semantics<parallel>, #tpu.dimension_semantics<arbitrary>], iteration_bounds = array<i64: 1, 1>, scalar_prefetch = 0 : i64, scratch_operands = 1 : i64, tpu.core_type = #tpu.core_type<tc>, window_params = [{transform_indices = @transform_0, window_bounds = array<i64: 8, 1024>}, {transform_indices = @transform_1, window_bounds = array<i64: 1024, 128>}, {pipeline_mode = #tpu.pipeline_mode<synchronous>, transform_indices = @transform_2, window_bounds = array<i64: 1, 128>}, {pipeline_mode = #tpu.pipeline_mode<synchronous>, transform_indices = @transform_3, window_bounds = array<i64: 128, 128>}, {pipeline_mode = #tpu.pipeline_mode<synchronous>, transform_indices = @transform_4, window_bounds = array<i64: 1, 128>}, {transform_indices = @transform_5, window_bounds = array<i64: 8, 128>}]} {
    %c0_i32 = arith.constant 0 : i32
    %0 = arith.cmpi eq, %arg1, %c0_i32 : i32
    %1 = arith.extui %0 : i1 to i32
    %c0_i32_0 = arith.constant 0 : i32
    %2 = arith.cmpi ne, %1, %c0_i32_0 : i32
    scf.if %2 {
      %cst_10 = arith.constant 0.000000e+00 : f32
      %13 = vector.broadcast %cst_10 : f32 to vector<8x128xf32>
      %c0_11 = arith.constant 0 : index
      %c0_12 = arith.constant 0 : index
      %14 = vector.load %arg8[%c0_11, %c0_12] : memref<8x128xf32, #tpu.memory_space<vmem>>, vector<8x128xf32>
      tpu.vector_store %arg8[%c0_11, %c0_12], %13 {strides = array<i32>} : memref<8x128xf32, #tpu.memory_space<vmem>>, vector<8x128xf32>,
    } else {
    }
    %c0 = arith.constant 0 : index
    %c0_1 = arith.constant 0 : index
    %3 = vector.load %arg8[%c0, %c0_1] : memref<8x128xf32, #tpu.memory_space<vmem>>, vector<8x128xf32>
    %c0_2 = arith.constant 0 : index
    %c0_3 = arith.constant 0 : index
    %4 = vector.load %arg2[%c0_2, %c0_3] : memref<8x1024xf32, #tpu.memory_space<vmem>>, vector<8x1024xf32>
    %5 = arith.truncf %4 : vector<8x1024xf32> to vector<8x1024xbf16>
    %c0_4 = arith.constant 0 : index
    %c0_5 = arith.constant 0 : index
    %6 = vector.load %arg3[%c0_4, %c0_5] : memref<1024x128xbf16, #tpu.memory_space<vmem>>, vector<1024x128xbf16>
    %cst = arith.constant dense<0.000000e+00> : vector<8x128xf32>
    %7 = tpu.matmul %5, %6, %cst {dimension_numbers = #tpu.dot_dimension_numbers<[1], [0], [0], [1], [0, 0, 1, 1], [], []>} : vector<8x1024xbf16>, vector<1024x128xbf16>, vector<8x128xf32> -> vector<8x128xf32>
    %8 = arith.addf %3, %7 : vector<8x128xf32>
    %c0_6 = arith.constant 0 : index
    %c0_7 = arith.constant 0 : index
    %9 = vector.load %arg8[%c0_6, %c0_7] : memref<8x128xf32, #tpu.memory_space<vmem>>, vector<8x128xf32>
    tpu.vector_store %arg8[%c0_6, %c0_7], %8 {strides = array<i32>} : memref<8x128xf32, #tpu.memory_space<vmem>>, vector<8x128xf32>,
    %c0_i32_8 = arith.constant 0 : i32
    %10 = arith.cmpi eq, %arg1, %c0_i32_8 : i32
    %11 = arith.extui %10 : i1 to i32
    %c0_i32_9 = arith.constant 0 : i32
    %12 = arith.cmpi ne, %11, %c0_i32_9 : i32
    scf.if %12 {
      %c0_10 = arith.constant 0 : index
      %c0_11 = arith.constant 0 : index
      %13 = vector.load %arg8[%c0_10, %c0_11] : memref<8x128xf32, #tpu.memory_space<vmem>>, vector<8x128xf32>
      %c0_12 = arith.constant 0 : index
      %c0_13 = arith.constant 0 : index
      %14 = vector.load %arg4[%c0_12, %c0_13] : memref<1x128xf32, #tpu.memory_space<vmem>>, vector<1x128xf32>
      %15 = vector.broadcast %14 : vector<1x128xf32> to vector<8x128xf32>
      %16 = arith.addf %13, %15 : vector<8x128xf32>
      %cst_14 = arith.constant 0.000000e+00 : f32
      %17 = vector.broadcast %cst_14 : f32 to vector<8x128xf32>
      %18 = arith.maximumf %16, %17 : vector<8x128xf32>
      %19 = arith.truncf %18 : vector<8x128xf32> to vector<8x128xbf16>
      %c0_15 = arith.constant 0 : index
      %c0_16 = arith.constant 0 : index
      %20 = vector.load %arg5[%c0_15, %c0_16] : memref<128x128xbf16, #tpu.memory_space<vmem>>, vector<128x128xbf16>
      %cst_17 = arith.constant dense<0.000000e+00> : vector<8x128xf32>
      %21 = tpu.matmul %19, %20, %cst_17 {dimension_numbers = #tpu.dot_dimension_numbers<[1], [0], [0], [1], [0, 0, 1, 1], [], []>} : vector<8x128xbf16>, vector<128x128xbf16>, vector<8x128xf32> -> vector<8x128xf32>
      %c0_18 = arith.constant 0 : index
      %c0_19 = arith.constant 0 : index
      %22 = vector.load %arg6[%c0_18, %c0_19] : memref<1x128xf32, #tpu.memory_space<vmem>>, vector<1x128xf32>
      %23 = vector.broadcast %22 : vector<1x128xf32> to vector<8x128xf32>
      %24 = arith.addf %21, %23 : vector<8x128xf32>
      %cst_20 = arith.constant dense<0xFF800000> : vector<8xf32>
      %25 = vector.multi_reduction <maximumf>, %24, %cst_20 [1] : vector<8x128xf32> to vector<8xf32>
      %26 = vector.shape_cast %25 : vector<8xf32> to vector<8x1xf32>
      %27 = vector.broadcast %26 : vector<8x1xf32> to vector<8x128xf32>
      %28 = arith.subf %24, %27 : vector<8x128xf32>
      %29 = math.exp %28 : vector<8x128xf32>
      %cst_21 = arith.constant dense<0.000000e+00> : vector<8xf32>
      %30 = vector.multi_reduction <add>, %29, %cst_21 [1] : vector<8x128xf32> to vector<8xf32>
      %31 = vector.shape_cast %30 : vector<8xf32> to vector<8x1xf32>
      %32 = tpu.reciprocal %31 {approx = true} : vector<8x1xf32> -> vector<8x1xf32>
      %33 = vector.broadcast %32 : vector<8x1xf32> to vector<8x128xf32>
      %34 = arith.mulf %29, %33 : vector<8x128xf32>
      %c0_22 = arith.constant 0 : index
      %c0_23 = arith.constant 0 : index
      %35 = vector.load %arg7[%c0_22, %c0_23] : memref<8x128xf32, #tpu.memory_space<vmem>>, vector<8x128xf32>
      tpu.vector_store %arg7[%c0_22, %c0_23], %34 {strides = array<i32>} : memref<8x128xf32, #tpu.memory_space<vmem>>, vector<8x128xf32>,
    } else {
    }
    return
  }
  func.func @transform_0(%arg0: i32, %arg1: i32) -> (i32, i32) {
    %c0_i32 = arith.constant 0 : i32
    return %arg0, %arg1 : i32, i32
  }
  func.func @transform_1(%arg0: i32, %arg1: i32) -> (i32, i32) {
    %c0_i32 = arith.constant 0 : i32
    %c0_i32_0 = arith.constant 0 : i32
    return %arg1, %c0_i32 : i32, i32
  }
  func.func @transform_2(%arg0: i32, %arg1: i32) -> (i32, i32) {
    %c0_i32 = arith.constant 0 : i32
    %c0_i32_0 = arith.constant 0 : i32
    %c0_i32_1 = arith.constant 0 : i32
    return %c0_i32, %c0_i32_0 : i32, i32
  }
  func.func @transform_3(%arg0: i32, %arg1: i32) -> (i32, i32) {
    %c0_i32 = arith.constant 0 : i32
    %c0_i32_0 = arith.constant 0 : i32
    %c0_i32_1 = arith.constant 0 : i32
    return %c0_i32, %c0_i32_0 : i32, i32
  }
  func.func @transform_4(%arg0: i32, %arg1: i32) -> (i32, i32) {
    %c0_i32 = arith.constant 0 : i32
    %c0_i32_0 = arith.constant 0 : i32
    %c0_i32_1 = arith.constant 0 : i32
    return %c0_i32, %c0_i32_0 : i32, i32
  }
  func.func @transform_5(%arg0: i32, %arg1: i32) -> (i32, i32) {
    %c0_i32 = arith.constant 0 : i32
    %c0_i32_0 = arith.constant 0 : i32
    return %arg0, %c0_i32 : i32, i32
  }
}

</mosaic_0001>

<llo_original>
// kernel: tpu_custom_call.1
$region0: #{tpu_custom_call.1}
  #allocation0 [shape = 'u32[]', space=smem, size = 0x4, offset = 0x4, fixed_abs, tag = 'smem constant byte address 0x4 - core index']
  #allocation1 [shape = 'u32[72,128]{1,0:T(1,128)}', space=vmem, size = 0x9000, scoped, tag = 'internal scratch']
  #allocation2 [shape = 'f32[8,128]{1,0:T(8,128)}', space=vmem, size = 0x1000, scoped, tag = 'scratch operand']
  %s0 = inlined_call_operand.hbm [shape: f32[8,1024], index: 0, kind: input, shape index: {}]
  %s1 = inlined_call_operand.hbm [shape: bf16[1024,128], index: 1, kind: input, shape index: {}]
  %s2 = inlined_call_operand.vmem [shape: f32[1,128], index: 2, kind: input, shape index: {}]
  %s3 = inlined_call_operand.hbm [shape: bf16[128,128], index: 3, kind: input, shape index: {}]
  %s4 = inlined_call_operand.vmem [shape: f32[1,128], index: 4, kind: input, shape index: {}]
  %s5 = inlined_call_operand.hbm [shape: f32[8,128], index: 5, kind: output, shape index: {}]
  %s6 = sld [smem:[#allocation0]]
  $region50: #{tpu_custom_call.1} parent=0
    _
  %s8 = ssub.s32 1, %s6
  %s9 = scalar_select 0, %s8, %s6
  $region1: #{tpu_custom_call.1} parent=0
    #allocation3 [shape = 'u8[32768]{0}', space=vmem, size = 0x8000, scoped, tag = 'input window, operand 0, single buffered']
    #allocation4 [shape = 's32[1]{0}', space=sflag, size = 0x4, scoped, tag = 'scoped memory for tpu_custom_call.1']
    #allocation5 [shape = 's32[1]{0}', space=sflag, size = 0x4, scoped, tag = 'scoped memory for tpu_custom_call.1']
    #allocation6 [shape = 'u8[262144]{0}', space=vmem, size = 0x40000, scoped, tag = 'input window, operand 1, single buffered']
    #allocation7 [shape = 's32[1]{0}', space=sflag, size = 0x4, scoped, tag = 'scoped memory for tpu_custom_call.1']
    #allocation8 [shape = 'u8[32768]{0}', space=vmem, size = 0x8000, scoped, tag = 'input window, operand 3, single buffered']
    #allocation9 [shape = 'u8[4096]{0}', space=vmem, size = 0x1000, scoped, tag = 'output window, operand 0, single buffered']
    %10 = vsyncpa [#allocation4], 0
    %11 = vsyncpa [#allocation7], 0
    %12 = vsyncpa [#allocation5], 0
    // Predicated region
    $region2: #{tpu_custom_call.1} parent=1 // pred_check
      _
    $region3: #{tpu_custom_call.1} parent=1 // pred_check_branch
      %14 = sbr.rel (0) target = $region5
    $region4: #{tpu_custom_call.1} parent=1 // pred_region
      %16 = vsyncadd [#allocation4], 0
      %s18 = sshll.u32 %s0, 4
      %s19 = int_to_ptr.hbm [resolvable:$true] %s18
      %s20 = sshll.u32 [#allocation3], 4
      %s21 = int_to_ptr.vmem [resolvable:$true] %s20
      %23 = dma.hbm_to_vmem [thread:$0]  %s19, 1024, %s21, [#allocation4]
    $region5: #{tpu_custom_call.1} parent=1 // pred_fallthru
      _
    // Predicated region
    $region6: #{tpu_custom_call.1} parent=1 // pred_check
      _
    $region7: #{tpu_custom_call.1} parent=1 // pred_check_branch
      %25 = sbr.rel (0) target = $region9
    $region8: #{tpu_custom_call.1} parent=1 // pred_region
      %27 = vsyncadd [#allocation7], 0
      %s28 = sshll.u32 %s1, 4
      %s29 = int_to_ptr.hbm [resolvable:$true] %s28
      %s30 = sshll.u32 [#allocation6], 4
      %s31 = int_to_ptr.vmem [resolvable:$true] %s30
      %36 = dma.hbm_to_vmem [thread:$0]  %s29, 8192, %s31, [#allocation7], 64, 64, 4
    $region9: #{tpu_custom_call.1} parent=1 // pred_fallthru
      _
    // Predicated region
    $region10: #{tpu_custom_call.1} parent=1 // pred_check
      _
    $region11: #{tpu_custom_call.1} parent=1 // pred_check_branch
      %38 = sbr.rel (0) target = $region13
    $region12: #{tpu_custom_call.1} parent=1 // pred_region
      _
    $region13: #{tpu_custom_call.1} parent=1 // pred_fallthru
      _
    // Predicated region
    $region14: #{tpu_custom_call.1} parent=1 // pred_check
      _
    $region15: #{tpu_custom_call.1} parent=1 // pred_check_branch
      %40 = sbr.rel (0) target = $region17
    $region16: #{tpu_custom_call.1} parent=1 // pred_region
      %42 = vsyncadd [#allocation7], 0
      %s43 = sshll.u32 %s3, 4
      %s44 = int_to_ptr.hbm [resolvable:$true] %s43
      %s45 = sshll.u32 [#allocation8], 4
      %s46 = int_to_ptr.vmem [resolvable:$true] %s45
      %51 = dma.hbm_to_vmem [thread:$0]  %s44, 1024, %s46, [#allocation7], 64, 64, 4
    $region17: #{tpu_custom_call.1} parent=1 // pred_fallthru
      _
    // Predicated region
    $region18: #{tpu_custom_call.1} parent=1 // pred_check
      _
    $region19: #{tpu_custom_call.1} parent=1 // pred_check_branch
      %53 = sbr.rel (0) target = $region21
    $region20: #{tpu_custom_call.1} parent=1 // pred_region
      _
    $region21: #{tpu_custom_call.1} parent=1 // pred_fallthru
      _
    // Predicated region
    $region22: #{tpu_custom_call.1} parent=1 // pred_check
      _
    $region23: #{tpu_custom_call.1} parent=1 // pred_check_branch
      %55 = sbr.rel (0) target = $region25
    $region24: #{tpu_custom_call.1} parent=1 // pred_region
      %57 = dma.done [#allocation4], 1024
    $region25: #{tpu_custom_call.1} parent=1 // pred_fallthru
      _
    // Predicated region
    $region26: #{tpu_custom_call.1} parent=1 // pred_check
      _
    $region27: #{tpu_custom_call.1} parent=1 // pred_check_branch
      %59 = sbr.rel (0) target = $region29
    $region28: #{tpu_custom_call.1} parent=1 // pred_region
      %61 = dma.done [#allocation7], 8192
    $region29: #{tpu_custom_call.1} parent=1 // pred_fallthru
      _
    // Predicated region
    $region30: #{tpu_custom_call.1} parent=1 // pred_check
      _
    $region31: #{tpu_custom_call.1} parent=1 // pred_check_branch
      %63 = sbr.rel (0) target = $region33
    $region32: #{tpu_custom_call.1} parent=1 // pred_region
      %65 = dma.done [#allocation7], 1024
    $region33: #{tpu_custom_call.1} parent=1 // pred_fallthru
      _
    %p66 = scmp.eq.s32.totalorder 0, 0
    // Predicated region
    $region34: #{tpu_custom_call.1} parent=1 // pred_check
      %p67 = pneg %p66
    $region35: #{tpu_custom_call.1} parent=1 // pred_check_branch
      %69 = sbr.rel (%p67) target = $region37
    $region36: #{tpu_custom_call.1} parent=1 // pred_region
      %70 = vst [vmem:[#allocation2] sm:$0xff] 0.0
    $region37: #{tpu_custom_call.1} parent=1 // pred_fallthru
      _
    %v71 = vld [vmem:[#allocation2] sm:$0xff]
    %v72 = vld [vmem:[#allocation3] sm:$0xff]
    %v73 = vld [vmem:[#allocation3 + $0x8] sm:$0xff]
    %v74 = vld [vmem:[#allocation3 + $0x10] sm:$0xff]
    %v75 = vld [vmem:[#allocation3 + $0x18] sm:$0xff]
    %v76 = vld [vmem:[#allocation3 + $0x20] sm:$0xff]
    %v77 = vld [vmem:[#allocation3 + $0x28] sm:$0xff]
    %v78 = vld [vmem:[#allocation3 + $0x30] sm:$0xff]
    %v79 = vld [vmem:[#allocation3 + $0x38] sm:$0xff]
    %v80 = vpack.c.bf16 %v72, %v72
    %v81 = vpack.c.bf16 %v73, %v73
    %v82 = vpack.c.bf16 %v74, %v74
    %v83 = vpack.c.bf16 %v75, %v75
    %v84 = vpack.c.bf16 %v76, %v76
    %v85 = vpack.c.bf16 %v77, %v77
    %v86 = vpack.c.bf16 %v78, %v78
    %v87 = vpack.c.bf16 %v79, %v79
    %v88 = vld [vmem:[#allocation6] sm:$0xf]
    %v89 = vld [vmem:[#allocation6 + $0x4] sm:$0xf]
    %v90 = vld [vmem:[#allocation6 + $0x8] sm:$0xf]
    %v91 = vld [vmem:[#allocation6 + $0xc] sm:$0xf]
    %v92 = vld [vmem:[#allocation6 + $0x10] sm:$0xf]
    %v93 = vld [vmem:[#allocation6 + $0x14] sm:$0xf]
    %v94 = vld [vmem:[#allocation6 + $0x18] sm:$0xf]
    %v95 = vld [vmem:[#allocation6 + $0x1c] sm:$0xf]
    %v96 = vld [vmem:[#allocation6 + $0x20] sm:$0xf]
    %v97 = vld [vmem:[#allocation6 + $0x24] sm:$0xf]
    %v98 = vld [vmem:[#allocation6 + $0x28] sm:$0xf]
    %v99 = vld [vmem:[#allocation6 + $0x2c] sm:$0xf]
    %v100 = vld [vmem:[#allocation6 + $0x30] sm:$0xf]
    %v101 = vld [vmem:[#allocation6 + $0x34] sm:$0xf]
    %v102 = vld [vmem:[#allocation6 + $0x38] sm:$0xf]
    %v103 = vld [vmem:[#allocation6 + $0x3c] sm:$0xf]
    %v104 = vld [vmem:[#allocation6 + $0x40] sm:$0xf]
    %v105 = vld [vmem:[#allocation6 + $0x44] sm:$0xf]
    %v106 = vld [vmem:[#allocation6 + $0x48] sm:$0xf]
    %v107 = vld [vmem:[#allocation6 + $0x4c] sm:$0xf]
    %v108 = vld [vmem:[#allocation6 + $0x50] sm:$0xf]
    %v109 = vld [vmem:[#allocation6 + $0x54] sm:$0xf]
    %v110 = vld [vmem:[#allocation6 + $0x58] sm:$0xf]
    %v111 = vld [vmem:[#allocation6 + $0x5c] sm:$0xf]
    %v112 = vld [vmem:[#allocation6 + $0x60] sm:$0xf]
    %v113 = vld [vmem:[#allocation6 + $0x64] sm:$0xf]
    %v114 = vld [vmem:[#allocation6 + $0x68] sm:$0xf]
    %v115 = vld [vmem:[#allocation6 + $0x6c] sm:$0xf]
    %v116 = vld [vmem:[#allocation6 + $0x70] sm:$0xf]
    %v117 = vld [vmem:[#allocation6 + $0x74] sm:$0xf]
    %v118 = vld [vmem:[#allocation6 + $0x78] sm:$0xf]
    %v119 = vld [vmem:[#allocation6 + $0x7c] sm:$0xf]
    %v120 = vld [vmem:[#allocation6 + $0x80] sm:$0xf]
    %v121 = vld [vmem:[#allocation6 + $0x84] sm:$0xf]
    %v122 = vld [vmem:[#allocation6 + $0x88] sm:$0xf]
    %v123 = vld [vmem:[#allocation6 + $0x8c] sm:$0xf]
    %v124 = vld [vmem:[#allocation6 + $0x90] sm:$0xf]
    %v125 = vld [vmem:[#allocation6 + $0x94] sm:$0xf]
    %v126 = vld [vmem:[#allocation6 + $0x98] sm:$0xf]
    %v127 = vld [vmem:[#allocation6 + $0x9c] sm:$0xf]
    %v128 = vld [vmem:[#allocation6 + $0xa0] sm:$0xf]
    %v129 = vld [vmem:[#allocation6 + $0xa4] sm:$0xf]
    %v130 = vld [vmem:[#allocation6 + $0xa8] sm:$0xf]
    %v131 = vld [vmem:[#allocation6 + $0xac] sm:$0xf]
    %v132 = vld [vmem:[#allocation6 + $0xb0] sm:$0xf]
    %v133 = vld [vmem:[#allocation6 + $0xb4] sm:$0xf]
    %v134 = vld [vmem:[#allocation6 + $0xb8] sm:$0xf]
    %v135 = vld [vmem:[#allocation6 + $0xbc] sm:$0xf]
    %v136 = vld [vmem:[#allocation6 + $0xc0] sm:$0xf]
    %v137 = vld [vmem:[#allocation6 + $0xc4] sm:$0xf]
    %v138 = vld [vmem:[#allocation6 + $0xc8] sm:$0xf]
    %v139 = vld [vmem:[#allocation6 + $0xcc] sm:$0xf]
    %v140 = vld [vmem:[#allocation6 + $0xd0] sm:$0xf]
    %v141 = vld [vmem:[#allocation6 + $0xd4] sm:$0xf]
    %v142 = vld [vmem:[#allocation6 + $0xd8] sm:$0xf]
    %v143 = vld [vmem:[#allocation6 + $0xdc] sm:$0xf]
    %v144 = vld [vmem:[#allocation6 + $0xe0] sm:$0xf]
    %v145 = vld [vmem:[#allocation6 + $0xe4] sm:$0xf]
    %v146 = vld [vmem:[#allocation6 + $0xe8] sm:$0xf]
    %v147 = vld [vmem:[#allocation6 + $0xec] sm:$0xf]
    %v148 = vld [vmem:[#allocation6 + $0xf0] sm:$0xf]
    %v149 = vld [vmem:[#allocation6 + $0xf4] sm:$0xf]
    %v150 = vld [vmem:[#allocation6 + $0xf8] sm:$0xf]
    %v151 = vld [vmem:[#allocation6 + $0xfc] sm:$0xf]
    %v152 = vld [vmem:[#allocation6 + $0x100] sm:$0xf]
    %v153 = vld [vmem:[#allocation6 + $0x104] sm:$0xf]
    %v154 = vld [vmem:[#allocation6 + $0x108] sm:$0xf]
    %v155 = vld [vmem:[#allocation6 + $0x10c] sm:$0xf]
    %v156 = vld [vmem:[#allocation6 + $0x110] sm:$0xf]
    %v157 = vld [vmem:[#allocation6 + $0x114] sm:$0xf]
    %v158 = vld [vmem:[#allocation6 + $0x118] sm:$0xf]
    %v159 = vld [vmem:[#allocation6 + $0x11c] sm:$0xf]
    %v160 = vld [vmem:[#allocation6 + $0x120] sm:$0xf]
    %v161 = vld [vmem:[#allocation6 + $0x124] sm:$0xf]
    %v162 = vld [vmem:[#allocation6 + $0x128] sm:$0xf]
    %v163 = vld [vmem:[#allocation6 + $0x12c] sm:$0xf]
    %v164 = vld [vmem:[#allocation6 + $0x130] sm:$0xf]
    %v165 = vld [vmem:[#allocation6 + $0x134] sm:$0xf]
    %v166 = vld [vmem:[#allocation6 + $0x138] sm:$0xf]
    %v167 = vld [vmem:[#allocation6 + $0x13c] sm:$0xf]
    %v168 = vld [vmem:[#allocation6 + $0x140] sm:$0xf]
    %v169 = vld [vmem:[#allocation6 + $0x144] sm:$0xf]
    %v170 = vld [vmem:[#allocation6 + $0x148] sm:$0xf]
    %v171 = vld [vmem:[#allocation6 + $0x14c] sm:$0xf]
    %v172 = vld [vmem:[#allocation6 + $0x150] sm:$0xf]
    %v173 = vld [vmem:[#allocation6 + $0x154] sm:$0xf]
    %v174 = vld [vmem:[#allocation6 + $0x158] sm:$0xf]
    %v175 = vld [vmem:[#allocation6 + $0x15c] sm:$0xf]
    %v176 = vld [vmem:[#allocation6 + $0x160] sm:$0xf]
    %v177 = vld [vmem:[#allocation6 + $0x164] sm:$0xf]
    %v178 = vld [vmem:[#allocation6 + $0x168] sm:$0xf]
    %v179 = vld [vmem:[#allocation6 + $0x16c] sm:$0xf]
    %v180 = vld [vmem:[#allocation6 + $0x170] sm:$0xf]
    %v181 = vld [vmem:[#allocation6 + $0x174] sm:$0xf]
    %v182 = vld [vmem:[#allocation6 + $0x178] sm:$0xf]
    %v183 = vld [vmem:[#allocation6 + $0x17c] sm:$0xf]
    %v184 = vld [vmem:[#allocation6 + $0x180] sm:$0xf]
    %v185 = vld [vmem:[#allocation6 + $0x184] sm:$0xf]
    %v186 = vld [vmem:[#allocation6 + $0x188] sm:$0xf]
    %v187 = vld [vmem:[#allocation6 + $0x18c] sm:$0xf]
    %v188 = vld [vmem:[#allocation6 + $0x190] sm:$0xf]
    %v189 = vld [vmem:[#allocation6 + $0x194] sm:$0xf]
    %v190 = vld [vmem:[#allocation6 + $0x198] sm:$0xf]
    %v191 = vld [vmem:[#allocation6 + $0x19c] sm:$0xf]
    %v192 = vld [vmem:[#allocation6 + $0x1a0] sm:$0xf]
    %v193 = vld [vmem:[#allocation6 + $0x1a4] sm:$0xf]
    %v194 = vld [vmem:[#allocation6 + $0x1a8] sm:$0xf]
    %v195 = vld [vmem:[#allocation6 + $0x1ac] sm:$0xf]
    %v196 = vld [vmem:[#allocation6 + $0x1b0] sm:$0xf]
    %v197 = vld [vmem:[#allocation6 + $0x1b4] sm:$0xf]
    %v198 = vld [vmem:[#allocation6 + $0x1b8] sm:$0xf]
    %v199 = vld [vmem:[#allocation6 + $0x1bc] sm:$0xf]
    %v200 = vld [vmem:[#allocation6 + $0x1c0] sm:$0xf]
    %v201 = vld [vmem:[#allocation6 + $0x1c4] sm:$0xf]
    %v202 = vld [vmem:[#allocation6 + $0x1c8] sm:$0xf]
    %v203 = vld [vmem:[#allocation6 + $0x1cc] sm:$0xf]
    %v204 = vld [vmem:[#allocation6 + $0x1d0] sm:$0xf]
    %v205 = vld [vmem:[#allocation6 + $0x1d4] sm:$0xf]
    %v206 = vld [vmem:[#allocation6 + $0x1d8] sm:$0xf]
    %v207 = vld [vmem:[#allocation6 + $0x1dc] sm:$0xf]
    %v208 = vld [vmem:[#allocation6 + $0x1e0] sm:$0xf]
    %v209 = vld [vmem:[#allocation6 + $0x1e4] sm:$0xf]
    %v210 = vld [vmem:[#allocation6 + $0x1e8] sm:$0xf]
    %v211 = vld [vmem:[#allocation6 + $0x1ec] sm:$0xf]
    %v212 = vld [vmem:[#allocation6 + $0x1f0] sm:$0xf]
    %v213 = vld [vmem:[#allocation6 + $0x1f4] sm:$0xf]
    %v214 = vld [vmem:[#allocation6 + $0x1f8] sm:$0xf]
    %v215 = vld [vmem:[#allocation6 + $0x1fc] sm:$0xf]
    %v344 = vunpack.c.l.b16 %v88
    %v345 = vunpack.c.l.b16 %v89
    %v346 = vunpack.c.l.b16 %v90
    %v347 = vunpack.c.l.b16 %v91
    %v348 = vunpack.c.l.b16 %v92
    %v349 = vunpack.c.l.b16 %v93
    %v350 = vunpack.c.l.b16 %v94
    %v351 = vunpack.c.l.b16 %v95
    %v352 = vunpack.c.l.b16 %v96
    %v353 = vunpack.c.l.b16 %v97
    %v354 = vunpack.c.l.b16 %v98
    %v355 = vunpack.c.l.b16 %v99
    %v356 = vunpack.c.l.b16 %v100
    %v357 = vunpack.c.l.b16 %v101
    %v358 = vunpack.c.l.b16 %v102
    %v359 = vunpack.c.l.b16 %v103
    %v360 = vunpack.c.l.b16 %v104
    %v361 = vunpack.c.l.b16 %v105
    %v362 = vunpack.c.l.b16 %v106
    %v363 = vunpack.c.l.b16 %v107
    %v364 = vunpack.c.l.b16 %v108
    %v365 = vunpack.c.l.b16 %v109
    %v366 = vunpack.c.l.b16 %v110
    %v367 = vunpack.c.l.b16 %v111
    %v368 = vunpack.c.l.b16 %v112
    %v369 = vunpack.c.l.b16 %v113
    %v370 = vunpack.c.l.b16 %v114
    %v371 = vunpack.c.l.b16 %v115
    %v372 = vunpack.c.l.b16 %v116
    %v373 = vunpack.c.l.b16 %v117
    %v374 = vunpack.c.l.b16 %v118
    %v375 = vunpack.c.l.b16 %v119
    %v376 = vunpack.c.l.b16 %v120
    %v377 = vunpack.c.l.b16 %v121
    %v378 = vunpack.c.l.b16 %v122
    %v379 = vunpack.c.l.b16 %v123
    %v380 = vunpack.c.l.b16 %v124
    %v381 = vunpack.c.l.b16 %v125
    %v382 = vunpack.c.l.b16 %v126
    %v383 = vunpack.c.l.b16 %v127
    %v384 = vunpack.c.l.b16 %v128
    %v385 = vunpack.c.l.b16 %v129
    %v386 = vunpack.c.l.b16 %v130
    %v387 = vunpack.c.l.b16 %v131
    %v388 = vunpack.c.l.b16 %v132
    %v389 = vunpack.c.l.b16 %v133
    %v390 = vunpack.c.l.b16 %v134
    %v391 = vunpack.c.l.b16 %v135
    %v392 = vunpack.c.l.b16 %v136
    %v393 = vunpack.c.l.b16 %v137
    %v394 = vunpack.c.l.b16 %v138
    %v395 = vunpack.c.l.b16 %v139
    %v396 = vunpack.c.l.b16 %v140
    %v397 = vunpack.c.l.b16 %v141
    %v398 = vunpack.c.l.b16 %v142
    %v399 = vunpack.c.l.b16 %v143
    %v400 = vunpack.c.l.b16 %v144
    %v401 = vunpack.c.l.b16 %v145
    %v402 = vunpack.c.l.b16 %v146
    %v403 = vunpack.c.l.b16 %v147
    %v404 = vunpack.c.l.b16 %v148
    %v405 = vunpack.c.l.b16 %v149
    %v406 = vunpack.c.l.b16 %v150
    %v407 = vunpack.c.l.b16 %v151
    %v408 = vunpack.c.l.b16 %v152
    %v409 = vunpack.c.l.b16 %v153
    %v410 = vunpack.c.l.b16 %v154
    %v411 = vunpack.c.l.b16 %v155
    %v412 = vunpack.c.l.b16 %v156
    %v413 = vunpack.c.l.b16 %v157
    %v414 = vunpack.c.l.b16 %v158
    %v415 = vunpack.c.l.b16 %v159
    %v416 = vunpack.c.l.b16 %v160
    %v417 = vunpack.c.l.b16 %v161
    %v418 = vunpack.c.l.b16 %v162
    %v419 = vunpack.c.l.b16 %v163
    %v420 = vunpack.c.l.b16 %v164
    %v421 = vunpack.c.l.b16 %v165
    %v422 = vunpack.c.l.b16 %v166
    %v423 = vunpack.c.l.b16 %v167
    %v424 = vunpack.c.l.b16 %v168
    %v425 = vunpack.c.l.b16 %v169
    %v426 = vunpack.c.l.b16 %v170
    %v427 = vunpack.c.l.b16 %v171
    %v428 = vunpack.c.l.b16 %v172
    %v429 = vunpack.c.l.b16 %v173
    %v430 = vunpack.c.l.b16 %v174
    %v431 = vunpack.c.l.b16 %v175
    %v432 = vunpack.c.l.b16 %v176
    %v433 = vunpack.c.l.b16 %v177
    %v434 = vunpack.c.l.b16 %v178
    %v435 = vunpack.c.l.b16 %v179
    %v436 = vunpack.c.l.b16 %v180
    %v437 = vunpack.c.l.b16 %v181
    %v438 = vunpack.c.l.b16 %v182
    %v439 = vunpack.c.l.b16 %v183
    %v440 = vunpack.c.l.b16 %v184
    %v441 = vunpack.c.l.b16 %v185
    %v442 = vunpack.c.l.b16 %v186
    %v443 = vunpack.c.l.b16 %v187
    %v444 = vunpack.c.l.b16 %v188
    %v445 = vunpack.c.l.b16 %v189
    %v446 = vunpack.c.l.b16 %v190
    %v447 = vunpack.c.l.b16 %v191
    %v448 = vunpack.c.l.b16 %v192
    %v449 = vunpack.c.l.b16 %v193
    %v450 = vunpack.c.l.b16 %v194
    %v451 = vunpack.c.l.b16 %v195
    %v452 = vunpack.c.l.b16 %v196
    %v453 = vunpack.c.l.b16 %v197
    %v454 = vunpack.c.l.b16 %v198
    %v455 = vunpack.c.l.b16 %v199
    %v456 = vunpack.c.l.b16 %v200
    %v457 = vunpack.c.l.b16 %v201
    %v458 = vunpack.c.l.b16 %v202
    %v459 = vunpack.c.l.b16 %v203
    %v460 = vunpack.c.l.b16 %v204
    %v461 = vunpack.c.l.b16 %v205
    %v462 = vunpack.c.l.b16 %v206
    %v463 = vunpack.c.l.b16 %v207
    %v464 = vunpack.c.l.b16 %v208
    %v465 = vunpack.c.l.b16 %v209
    %v466 = vunpack.c.l.b16 %v210
    %v467 = vunpack.c.l.b16 %v211
    %v468 = vunpack.c.l.b16 %v212
    %v469 = vunpack.c.l.b16 %v213
    %v470 = vunpack.c.l.b16 %v214
    %v471 = vunpack.c.l.b16 %v215
    %v472 = vpack.c.b16 %v345, %v344
    %v473 = vpack.c.b16 %v347, %v346
    %v474 = vpack.c.b16 %v349, %v348
    %v475 = vpack.c.b16 %v351, %v350
    %v476 = vpack.c.b16 %v353, %v352
    %v477 = vpack.c.b16 %v355, %v354
    %v478 = vpack.c.b16 %v357, %v356
    %v479 = vpack.c.b16 %v359, %v358
    %v480 = vpack.c.b16 %v361, %v360
    %v481 = vpack.c.b16 %v363, %v362
    %v482 = vpack.c.b16 %v365, %v364
    %v483 = vpack.c.b16 %v367, %v366
    %v484 = vpack.c.b16 %v369, %v368
    %v485 = vpack.c.b16 %v371, %v370
    %v486 = vpack.c.b16 %v373, %v372
    %v487 = vpack.c.b16 %v375, %v374
    %v488 = vpack.c.b16 %v377, %v376
    %v489 = vpack.c.b16 %v379, %v378
    %v490 = vpack.c.b16 %v381, %v380
    %v491 = vpack.c.b16 %v383, %v382
    %v492 = vpack.c.b16 %v385, %v384
    %v493 = vpack.c.b16 %v387, %v386
    %v494 = vpack.c.b16 %v389, %v388
    %v495 = vpack.c.b16 %v391, %v390
    %v496 = vpack.c.b16 %v393, %v392
    %v497 = vpack.c.b16 %v395, %v394
    %v498 = vpack.c.b16 %v397, %v396
    %v499 = vpack.c.b16 %v399, %v398
    %v500 = vpack.c.b16 %v401, %v400
    %v501 = vpack.c.b16 %v403, %v402
    %v502 = vpack.c.b16 %v405, %v404
    %v503 = vpack.c.b16 %v407, %v406
    %v504 = vpack.c.b16 %v409, %v408
    %v505 = vpack.c.b16 %v411, %v410
    %v506 = vpack.c.b16 %v413, %v412
    %v507 = vpack.c.b16 %v415, %v414
    %v508 = vpack.c.b16 %v417, %v416
    %v509 = vpack.c.b16 %v419, %v418
    %v510 = vpack.c.b16 %v421, %v420
    %v511 = vpack.c.b16 %v423, %v422
    %v512 = vpack.c.b16 %v425, %v424
    %v513 = vpack.c.b16 %v427, %v426
    %v514 = vpack.c.b16 %v429, %v428
    %v515 = vpack.c.b16 %v431, %v430
    %v516 = vpack.c.b16 %v433, %v432
    %v517 = vpack.c.b16 %v435, %v434
    %v518 = vpack.c.b16 %v437, %v436
    %v519 = vpack.c.b16 %v439, %v438
    %v520 = vpack.c.b16 %v441, %v440
    %v521 = vpack.c.b16 %v443, %v442
    %v522 = vpack.c.b16 %v445, %v444
    %v523 = vpack.c.b16 %v447, %v446
    %v524 = vpack.c.b16 %v449, %v448
    %v525 = vpack.c.b16 %v451, %v450
    %v526 = vpack.c.b16 %v453, %v452
    %v527 = vpack.c.b16 %v455, %v454
    %v528 = vpack.c.b16 %v457, %v456
    %v529 = vpack.c.b16 %v459, %v458
    %v530 = vpack.c.b16 %v461, %v460
    %v531 = vpack.c.b16 %v463, %v462
    %v532 = vpack.c.b16 %v465, %v464
    %v533 = vpack.c.b16 %v467, %v466
    %v534 = vpack.c.b16 %v469, %v468
    %v535 = vpack.c.b16 %v471, %v470
    %600 = vmatpush.bf16.msra.mxu0 %v479
    %601 = vmatpush.bf16.msra.mxu0 %v478
    %602 = vmatpush.bf16.msra.mxu0 %v477
    %603 = vmatpush.bf16.msra.mxu0 %v476
    %604 = vmatpush.bf16.msra.mxu0 %v475
    %605 = vmatpush.bf16.msra.mxu0 %v474
    %606 = vmatpush.bf16.msra.mxu0 %v473
    %607 = vmatpush.bf16.msra.mxu0 %v472
    %608 = vmatmul.bf16.gmra.mxu0 %v80
    %v609 = vpop.f32.mrf.mxu0
    %v610 = vadd.f32 0.0, %v609
    %v611 = vpop.f32.mrf.mxu0
    %612 = vdwg.mxu0
    %613 = vmatpush.bf16.msra.mxu0 %v487
    %614 = vmatpush.bf16.msra.mxu0 %v486
    %615 = vmatpush.bf16.msra.mxu0 %v485
    %616 = vmatpush.bf16.msra.mxu0 %v484
    %617 = vmatpush.bf16.msra.mxu0 %v483
    %618 = vmatpush.bf16.msra.mxu0 %v482
    %619 = vmatpush.bf16.msra.mxu0 %v481
    %620 = vmatpush.bf16.msra.mxu0 %v480
    %621 = vmatmul.bf16.gmra.mxu0 %v81
    %v622 = vpop.f32.mrf.mxu0
    %v623 = vadd.f32 %v610, %v622
    %v624 = vpop.f32.mrf.mxu0
    %625 = vdwg.mxu0
    %626 = vmatpush.bf16.msra.mxu0 %v495
    %627 = vmatpush.bf16.msra.mxu0 %v494
    %628 = vmatpush.bf16.msra.mxu0 %v493
    %629 = vmatpush.bf16.msra.mxu0 %v492
    %630 = vmatpush.bf16.msra.mxu0 %v491
    %631 = vmatpush.bf16.msra.mxu0 %v490
    %632 = vmatpush.bf16.msra.mxu0 %v489
    %633 = vmatpush.bf16.msra.mxu0 %v488
    %634 = vmatmul.bf16.gmra.mxu0 %v82
    %v635 = vpop.f32.mrf.mxu0
    %v636 = vadd.f32 %v623, %v635
    %v637 = vpop.f32.mrf.mxu0
    %638 = vdwg.mxu0
    %639 = vmatpush.bf16.msra.mxu0 %v503
    %640 = vmatpush.bf16.msra.mxu0 %v502
    %641 = vmatpush.bf16.msra.mxu0 %v501
    %642 = vmatpush.bf16.msra.mxu0 %v500
    %643 = vmatpush.bf16.msra.mxu0 %v499
    %644 = vmatpush.bf16.msra.mxu0 %v498
    %645 = vmatpush.bf16.msra.mxu0 %v497
    %646 = vmatpush.bf16.msra.mxu0 %v496
    %647 = vmatmul.bf16.gmra.mxu0 %v83
    %v648 = vpop.f32.mrf.mxu0
    %v649 = vadd.f32 %v636, %v648
    %v650 = vpop.f32.mrf.mxu0
    %651 = vdwg.mxu0
    %652 = vmatpush.bf16.msra.mxu0 %v511
    %653 = vmatpush.bf16.msra.mxu0 %v510
    %654 = vmatpush.bf16.msra.mxu0 %v509
    %655 = vmatpush.bf16.msra.mxu0 %v508
    %656 = vmatpush.bf16.msra.mxu0 %v507
    %657 = vmatpush.bf16.msra.mxu0 %v506
    %658 = vmatpush.bf16.msra.mxu0 %v505
    %659 = vmatpush.bf16.msra.mxu0 %v504
    %660 = vmatmul.bf16.gmra.mxu0 %v84
    %v661 = vpop.f32.mrf.mxu0
    %v662 = vadd.f32 %v649, %v661
    %v663 = vpop.f32.mrf.mxu0
    %664 = vdwg.mxu0
    %665 = vmatpush.bf16.msra.mxu0 %v519
    %666 = vmatpush.bf16.msra.mxu0 %v518
    %667 = vmatpush.bf16.msra.mxu0 %v517
    %668 = vmatpush.bf16.msra.mxu0 %v516
    %669 = vmatpush.bf16.msra.mxu0 %v515
    %670 = vmatpush.bf16.msra.mxu0 %v514
    %671 = vmatpush.bf16.msra.mxu0 %v513
    %672 = vmatpush.bf16.msra.mxu0 %v512
    %673 = vmatmul.bf16.gmra.mxu0 %v85
    %v674 = vpop.f32.mrf.mxu0
    %v675 = vadd.f32 %v662, %v674
    %v676 = vpop.f32.mrf.mxu0
    %677 = vdwg.mxu0
    %678 = vmatpush.bf16.msra.mxu0 %v527
    %679 = vmatpush.bf16.msra.mxu0 %v526
    %680 = vmatpush.bf16.msra.mxu0 %v525
    %681 = vmatpush.bf16.msra.mxu0 %v524
    %682 = vmatpush.bf16.msra.mxu0 %v523
    %683 = vmatpush.bf16.msra.mxu0 %v522
    %684 = vmatpush.bf16.msra.mxu0 %v521
    %685 = vmatpush.bf16.msra.mxu0 %v520
    %686 = vmatmul.bf16.gmra.mxu0 %v86
    %v687 = vpop.f32.mrf.mxu0
    %v688 = vadd.f32 %v675, %v687
    %v689 = vpop.f32.mrf.mxu0
    %690 = vdwg.mxu0
    %691 = vmatpush.bf16.msra.mxu0 %v535
    %692 = vmatpush.bf16.msra.mxu0 %v534
    %693 = vmatpush.bf16.msra.mxu0 %v533
    %694 = vmatpush.bf16.msra.mxu0 %v532
    %695 = vmatpush.bf16.msra.mxu0 %v531
    %696 = vmatpush.bf16.msra.mxu0 %v530
    %697 = vmatpush.bf16.msra.mxu0 %v529
    %698 = vmatpush.bf16.msra.mxu0 %v528
    %699 = vmatmul.bf16.gmra.mxu0 %v87
    %v700 = vpop.f32.mrf.mxu0
    %v701 = vadd.f32 %v688, %v700
    %v702 = vpop.f32.mrf.mxu0
    %703 = vdwg.mxu0
    %v704 = vadd.f32 %v71, %v701
    %705 = vst [vmem:[#allocation2] sm:$0xff] %v704
    // Predicated region
    $region38: #{tpu_custom_call.1} parent=1 // pred_check
      %p706 = pneg %p66
    $region39: #{tpu_custom_call.1} parent=1 // pred_check_branch
      %708 = sbr.rel (%p706) target = $region41
    $region40: #{tpu_custom_call.1} parent=1 // pred_region
      %v709 = vld [vmem:[#allocation2] sm:$0xff]
      %v710 = vld [vmem:[%s2] sm:$0x1]
      %v712 = vperm.slane %v710, 0
      %v714 = vadd.f32 %v709, %v712
      %v715 = vmax.f32 %v714, 0.0
      %v716 = vpack.c.bf16 %v715, %v715
      %v717 = vld [vmem:[#allocation8] sm:$0xf]
      %v718 = vld [vmem:[#allocation8 + $0x4] sm:$0xf]
      %v719 = vld [vmem:[#allocation8 + $0x8] sm:$0xf]
      %v720 = vld [vmem:[#allocation8 + $0xc] sm:$0xf]
      %v721 = vld [vmem:[#allocation8 + $0x10] sm:$0xf]
      %v722 = vld [vmem:[#allocation8 + $0x14] sm:$0xf]
      %v723 = vld [vmem:[#allocation8 + $0x18] sm:$0xf]
      %v724 = vld [vmem:[#allocation8 + $0x1c] sm:$0xf]
      %v725 = vld [vmem:[#allocation8 + $0x20] sm:$0xf]
      %v726 = vld [vmem:[#allocation8 + $0x24] sm:$0xf]
      %v727 = vld [vmem:[#allocation8 + $0x28] sm:$0xf]
      %v728 = vld [vmem:[#allocation8 + $0x2c] sm:$0xf]
      %v729 = vld [vmem:[#allocation8 + $0x30] sm:$0xf]
      %v730 = vld [vmem:[#allocation8 + $0x34] sm:$0xf]
      %v731 = vld [vmem:[#allocation8 + $0x38] sm:$0xf]
      %v732 = vld [vmem:[#allocation8 + $0x3c] sm:$0xf]
      %v733 = vld [vmem:[%s4] sm:$0x1]
      %v735 = vperm.slane %v733, 0
      %v753 = vunpack.c.l.b16 %v717
      %v754 = vunpack.c.l.b16 %v718
      %v755 = vunpack.c.l.b16 %v719
      %v756 = vunpack.c.l.b16 %v720
      %v757 = vunpack.c.l.b16 %v721
      %v758 = vunpack.c.l.b16 %v722
      %v759 = vunpack.c.l.b16 %v723
      %v760 = vunpack.c.l.b16 %v724
      %v761 = vunpack.c.l.b16 %v725
      %v762 = vunpack.c.l.b16 %v726
      %v763 = vunpack.c.l.b16 %v727
      %v764 = vunpack.c.l.b16 %v728
      %v765 = vunpack.c.l.b16 %v729
      %v766 = vunpack.c.l.b16 %v730
      %v767 = vunpack.c.l.b16 %v731
      %v768 = vunpack.c.l.b16 %v732
      %v769 = vpack.c.b16 %v754, %v753
      %v770 = vpack.c.b16 %v756, %v755
      %v771 = vpack.c.b16 %v758, %v757
      %v772 = vpack.c.b16 %v760, %v759
      %v773 = vpack.c.b16 %v762, %v761
      %v774 = vpack.c.b16 %v764, %v763
      %v775 = vpack.c.b16 %v766, %v765
      %v776 = vpack.c.b16 %v768, %v767
      %785 = vmatpush.bf16.msra.mxu0 %v776
      %786 = vmatpush.bf16.msra.mxu0 %v775
      %787 = vmatpush.bf16.msra.mxu0 %v774
      %788 = vmatpush.bf16.msra.mxu0 %v773
      %789 = vmatpush.bf16.msra.mxu0 %v772
      %790 = vmatpush.bf16.msra.mxu0 %v771
      %791 = vmatpush.bf16.msra.mxu0 %v770
      %792 = vmatpush.bf16.msra.mxu0 %v769
      %793 = vmatmul.bf16.gmra.mxu0 %v716
      %v794 = vpop.f32.mrf.mxu0
      %v795 = vadd.f32 %v735, %v794
      %v796 = vpop.f32.mrf.mxu0
      %797 = vdwg.mxu0
      %798 = vmax.xlane.f32.xlu0 %v795
      %v799 = vpop.xlane.xlu0 %798
      %v800 = vsub.f32 %v795, %v799
      %v801 = vmul.f32 %v800, 1.442695
      %v802 = vpow.pop %v801
      %803 = vadd.xlane.f32.xlu0 %v802
      %v804 = vpop.xlane.xlu0 %803
      %v805 = vrcp.pop %v804
      %v806 = vmul.f32 %v802, %v805
      %807 = vst [vmem:[#allocation9] sm:$0xff] %v806
    $region41: #{tpu_custom_call.1} parent=1 // pred_fallthru
      _
    // Predicated region
    $region42: #{tpu_custom_call.1} parent=1 // pred_check
      _
    $region43: #{tpu_custom_call.1} parent=1 // pred_check_branch
      %809 = sbr.rel (0) target = $region45
    $region44: #{tpu_custom_call.1} parent=1 // pred_region
      %811 = vsyncadd [#allocation5], 0
      %s813 = sshll.u32 [#allocation9], 4
      %s814 = int_to_ptr.vmem [resolvable:$true] %s813
      %s815 = sshll.u32 %s5, 4
      %s816 = int_to_ptr.hbm [resolvable:$true] %s815
      %818 = dma.vmem_to_hbm [thread:$0]  %s814, 128, %s816, [#allocation5]
    $region45: #{tpu_custom_call.1} parent=1 // pred_fallthru
      _
    // Predicated region
    $region46: #{tpu_custom_call.1} parent=1 // pred_check
      _
    $region47: #{tpu_custom_call.1} parent=1 // pred_check_branch
      %820 = sbr.rel (0) target = $region49
    $region48: #{tpu_custom_call.1} parent=1 // pred_region
      %822 = dma.done [#allocation5], 128
    $region49: #{tpu_custom_call.1} parent=1 // pred_fallthru
      _
    %823 = vsyncpa [#allocation4], 1
    %824 = vsyncpa [#allocation7], 1
    %825 = vsyncpa [#allocation5], 1

</llo_original>
